<compile_context>
chip_gen: v5e
topology: v5e:2x2
jax: 0.10.0
libtpu: 0.0.40
codegen_flags: <defaults>
</compile_context>

<pallas_src>
import functools

import jax
import jax.numpy as jnp
from jax import lax
from jax.experimental import pallas as pl
from jax.experimental.pallas import tpu as pltpu

_RING = 2  # ring slots; 2 slots x 2 copies/step -> up to 4 DMAs in flight


def _n2c_dma_kernel(x_ref, o_ref, sem, *, half):
    # x_ref: (B, CHW) raw HBM ref (input rows, flattened C*H*W)
    # o_ref: (B, CHW) raw HBM ref; out row 2*b   <- in row b        (1st half)
    #                              out row 2*b+1 <- in row half + b (2nd half)
    # sem:   (_RING, 2) DMA semaphores — ring of in-flight copy pairs.
    b = pl.program_id(0)
    slot = lax.rem(b, _RING)

    def _wait_slot(s):
        # The refs here only determine the wait size; every copy moves
        # exactly one contiguous CHW row, so row 0 is a valid stand-in.
        pltpu.make_async_copy(x_ref.at[0], o_ref.at[0], sem.at[s, 0]).wait()
        pltpu.make_async_copy(x_ref.at[0], o_ref.at[0], sem.at[s, 1]).wait()

    # Free this ring slot: wait for the pair issued _RING steps ago.
    @pl.when(b >= _RING)
    def _():
        _wait_slot(slot)

    # Issue this step's two fully contiguous HBM->HBM copies.
    pltpu.make_async_copy(x_ref.at[b], o_ref.at[2 * b], sem.at[slot, 0]).start()
    pltpu.make_async_copy(
        x_ref.at[half + b], o_ref.at[2 * b + 1], sem.at[slot, 1]
    ).start()

    # Last grid step: drain everything still in flight (correctness — the
    # kernel must not return with outstanding DMAs).
    @pl.when(b == half - 1)
    def _():
        for i in range(min(_RING, half)):
            _wait_slot(lax.rem(b - i, _RING))


def number_to_channel(x):
    B, C, H, W = x.shape
    assert B % 2 == 0, "NumberToChannel requires an even batch size"
    half = B // 2
    chw = C * H * W
    itemsize = jnp.dtype(x.dtype).itemsize

    # Free reshape on contiguous NCHW: one row per batch element.
    x2d = x.reshape(B, chw)

    out = pl.pallas_call(
        functools.partial(_n2c_dma_kernel, half=half),
        out_shape=jax.ShapeDtypeStruct((B, chw), x.dtype),
        grid_spec=pltpu.PrefetchScalarGridSpec(
            num_scalar_prefetch=0,
            grid=(half,),
            in_specs=[pl.BlockSpec(memory_space=pl.ANY)],   # raw HBM ref
            out_specs=pl.BlockSpec(memory_space=pl.ANY),    # raw HBM ref
            scratch_shapes=[pltpu.SemaphoreType.DMA((_RING, 2))],
        ),
        compiler_params=pltpu.CompilerParams(
            # Sequential grid: required by the ring drain; issue rate is not
            # the bottleneck for a pure-DMA relayout.
            dimension_semantics=("arbitrary",),
        ),
        cost_estimate=pl.CostEstimate(
            flops=0,
            transcendentals=0,
            bytes_accessed=2 * B * chw * itemsize,  # read + write, once each
        ),
    )(x2d)

    # (B, CHW) with rows interleaved as [x[b], x[half+b]] per output batch
    # -> (half, 2*C, H, W): free reshape, exactly torch.cat(chunk(x,2,0), 1).
    return out.reshape(half, 2 * C, H, W)


if __name__ == "__main__":
    key = jax.random.PRNGKey(0)
    B, C, H, W = 2, 4, 16, 16
    x = jax.random.normal(key, (B, C, H, W), dtype=jnp.float32)

    out = jax.block_until_ready(number_to_channel(x))

    # Pure-JAX reference matching the PyTorch forward exactly:
    x1, x2 = x[: B // 2], x[B // 2:]
    ref = jnp.concatenate([x1, x2], axis=1)

    assert out.shape == (B // 2, 2 * C, H, W), out.shape
    assert out.dtype == x.dtype
    assert jnp.array_equal(out, ref), "mismatch vs reference"

    print("KERNEL_OK")
</pallas_src>

<mosaic_0001>
module attributes {stable_mosaic.version = 11 : i64} {
  func.func @_n2c_dma_kernel(%arg0: i32, %arg1: memref<2x1024xf32, #tpu.memory_space<any>>, %arg2: memref<2x1024xf32, #tpu.memory_space<any>>, %arg3: memref<2x2x!tpu.dma_semaphore, #tpu.memory_space<semaphore_mem>>) attributes {dimension_semantics = [#tpu.dimension_semantics<arbitrary>], iteration_bounds = array<i64: 1>, scalar_prefetch = 0 : i64, scratch_operands = 1 : i64, tpu.core_type = #tpu.core_type<tc>, window_params = [{}, {}]} {
    %c2_i32 = arith.constant 2 : i32
    %0 = arith.remsi %arg0, %c2_i32 : i32
    %c2_i32_0 = arith.constant 2 : i32
    %1 = arith.cmpi sge, %arg0, %c2_i32_0 : i32
    %2 = arith.extui %1 : i1 to i32
    %c0_i32 = arith.constant 0 : i32
    %3 = arith.cmpi ne, %2, %c0_i32 : i32
    scf.if %3 {
      %c0_i32_12 = arith.constant 0 : i32
      %c0_i32_13 = arith.constant 0 : i32
      %c0_i32_14 = arith.constant 0 : i32
      %c0_i32_15 = arith.constant 0 : i32
      %23 = tpu.memref_slice %arg1[%c0_i32_12, %c0_i32_15] : memref<2x1024xf32, #tpu.memory_space<any>> -> memref<1x1024xf32, #tpu.memory_space<any>>
      %24 = tpu.memref_squeeze %23 : memref<1x1024xf32, #tpu.memory_space<any>> -> memref<1024xf32, #tpu.memory_space<any>>
      %c0_i32_16 = arith.constant 0 : i32
      %25 = tpu.memref_slice %arg2[%c0_i32_13, %c0_i32_16] : memref<2x1024xf32, #tpu.memory_space<any>> -> memref<1x1024xf32, #tpu.memory_space<any>>
      %26 = tpu.memref_squeeze %25 : memref<1x1024xf32, #tpu.memory_space<any>> -> memref<1024xf32, #tpu.memory_space<any>>
      %27 = tpu.memref_slice %arg3[%0, %c0_i32_14] : memref<2x2x!tpu.dma_semaphore, #tpu.memory_space<semaphore_mem>> -> memref<1x1x!tpu.dma_semaphore, #tpu.memory_space<semaphore_mem>>
      %28 = tpu.memref_squeeze %27 : memref<1x1x!tpu.dma_semaphore, #tpu.memory_space<semaphore_mem>> -> memref<!tpu.dma_semaphore, #tpu.memory_space<semaphore_mem>>
      tpu.wait_dma2 semaphore(%28 : memref<!tpu.dma_semaphore, #tpu.memory_space<semaphore_mem>>) src(%24 : memref<1024xf32, #tpu.memory_space<any>>) dst(%26 : memref<1024xf32, #tpu.memory_space<any>>)
      %c0_i32_17 = arith.constant 0 : i32
      %c0_i32_18 = arith.constant 0 : i32
      %c1_i32_19 = arith.constant 1 : i32
      %c0_i32_20 = arith.constant 0 : i32
      %29 = tpu.memref_slice %arg1[%c0_i32_17, %c0_i32_20] : memref<2x1024xf32, #tpu.memory_space<any>> -> memref<1x1024xf32, #tpu.memory_space<any>>
      %30 = tpu.memref_squeeze %29 : memref<1x1024xf32, #tpu.memory_space<any>> -> memref<1024xf32, #tpu.memory_space<any>>
      %c0_i32_21 = arith.constant 0 : i32
      %31 = tpu.memref_slice %arg2[%c0_i32_18, %c0_i32_21] : memref<2x1024xf32, #tpu.memory_space<any>> -> memref<1x1024xf32, #tpu.memory_space<any>>
      %32 = tpu.memref_squeeze %31 : memref<1x1024xf32, #tpu.memory_space<any>> -> memref<1024xf32, #tpu.memory_space<any>>
      %33 = tpu.memref_slice %arg3[%0, %c1_i32_19] : memref<2x2x!tpu.dma_semaphore, #tpu.memory_space<semaphore_mem>> -> memref<1x1x!tpu.dma_semaphore, #tpu.memory_space<semaphore_mem>>
      %34 = tpu.memref_squeeze %33 : memref<1x1x!tpu.dma_semaphore, #tpu.memory_space<semaphore_mem>> -> memref<!tpu.dma_semaphore, #tpu.memory_space<semaphore_mem>>
      tpu.wait_dma2 semaphore(%34 : memref<!tpu.dma_semaphore, #tpu.memory_space<semaphore_mem>>) src(%30 : memref<1024xf32, #tpu.memory_space<any>>) dst(%32 : memref<1024xf32, #tpu.memory_space<any>>)
    } else {
    }
    %c2_i32_1 = arith.constant 2 : i32
    %4 = arith.muli %c2_i32_1, %arg0 : i32
    %c0_i32_2 = arith.constant 0 : i32
    %c0_i32_3 = arith.constant 0 : i32
    %5 = tpu.memref_slice %arg1[%arg0, %c0_i32_3] : memref<2x1024xf32, #tpu.memory_space<any>> -> memref<1x1024xf32, #tpu.memory_space<any>>
    %6 = tpu.memref_squeeze %5 : memref<1x1024xf32, #tpu.memory_space<any>> -> memref<1024xf32, #tpu.memory_space<any>>
    %c0_i32_4 = arith.constant 0 : i32
    %7 = tpu.memref_slice %arg2[%4, %c0_i32_4] : memref<2x1024xf32, #tpu.memory_space<any>> -> memref<1x1024xf32, #tpu.memory_space<any>>
    %8 = tpu.memref_squeeze %7 : memref<1x1024xf32, #tpu.memory_space<any>> -> memref<1024xf32, #tpu.memory_space<any>>
    %9 = tpu.memref_slice %arg3[%0, %c0_i32_2] : memref<2x2x!tpu.dma_semaphore, #tpu.memory_space<semaphore_mem>> -> memref<1x1x!tpu.dma_semaphore, #tpu.memory_space<semaphore_mem>>
    %10 = tpu.memref_squeeze %9 : memref<1x1x!tpu.dma_semaphore, #tpu.memory_space<semaphore_mem>> -> memref<!tpu.dma_semaphore, #tpu.memory_space<semaphore_mem>>
    tpu.enqueue_dma source(%6 : memref<1024xf32, #tpu.memory_space<any>>) target(%8 : memref<1024xf32, #tpu.memory_space<any>>) target_semaphore(%10 : memref<!tpu.dma_semaphore, #tpu.memory_space<semaphore_mem>>)
    %c1_i32 = arith.constant 1 : i32
    %11 = arith.addi %c1_i32, %arg0 : i32
    %c2_i32_5 = arith.constant 2 : i32
    %12 = arith.muli %c2_i32_5, %arg0 : i32
    %c1_i32_6 = arith.constant 1 : i32
    %13 = arith.addi %12, %c1_i32_6 : i32
    %c1_i32_7 = arith.constant 1 : i32
    %c0_i32_8 = arith.constant 0 : i32
    %14 = tpu.memref_slice %arg1[%11, %c0_i32_8] : memref<2x1024xf32, #tpu.memory_space<any>> -> memref<1x1024xf32, #tpu.memory_space<any>>
    %15 = tpu.memref_squeeze %14 : memref<1x1024xf32, #tpu.memory_space<any>> -> memref<1024xf32, #tpu.memory_space<any>>
    %c0_i32_9 = arith.constant 0 : i32
    %16 = tpu.memref_slice %arg2[%13, %c0_i32_9] : memref<2x1024xf32, #tpu.memory_space<any>> -> memref<1x1024xf32, #tpu.memory_space<any>>
    %17 = tpu.memref_squeeze %16 : memref<1x1024xf32, #tpu.memory_space<any>> -> memref<1024xf32, #tpu.memory_space<any>>
    %18 = tpu.memref_slice %arg3[%0, %c1_i32_7] : memref<2x2x!tpu.dma_semaphore, #tpu.memory_space<semaphore_mem>> -> memref<1x1x!tpu.dma_semaphore, #tpu.memory_space<semaphore_mem>>
    %19 = tpu.memref_squeeze %18 : memref<1x1x!tpu.dma_semaphore, #tpu.memory_space<semaphore_mem>> -> memref<!tpu.dma_semaphore, #tpu.memory_space<semaphore_mem>>
    tpu.enqueue_dma source(%15 : memref<1024xf32, #tpu.memory_space<any>>) target(%17 : memref<1024xf32, #tpu.memory_space<any>>) target_semaphore(%19 : memref<!tpu.dma_semaphore, #tpu.memory_space<semaphore_mem>>)
    %c0_i32_10 = arith.constant 0 : i32
    %20 = arith.cmpi eq, %arg0, %c0_i32_10 : i32
    %21 = arith.extui %20 : i1 to i32
    %c0_i32_11 = arith.constant 0 : i32
    %22 = arith.cmpi ne, %21, %c0_i32_11 : i32
    scf.if %22 {
      %c0_i32_12 = arith.constant 0 : i32
      %23 = arith.subi %arg0, %c0_i32_12 : i32
      %c2_i32_13 = arith.constant 2 : i32
      %24 = arith.remsi %23, %c2_i32_13 : i32
      %c0_i32_14 = arith.constant 0 : i32
      %c0_i32_15 = arith.constant 0 : i32
      %c0_i32_16 = arith.constant 0 : i32
      %c0_i32_17 = arith.constant 0 : i32
      %25 = tpu.memref_slice %arg1[%c0_i32_14, %c0_i32_17] : memref<2x1024xf32, #tpu.memory_space<any>> -> memref<1x1024xf32, #tpu.memory_space<any>>
      %26 = tpu.memref_squeeze %25 : memref<1x1024xf32, #tpu.memory_space<any>> -> memref<1024xf32, #tpu.memory_space<any>>
      %c0_i32_18 = arith.constant 0 : i32
      %27 = tpu.memref_slice %arg2[%c0_i32_15, %c0_i32_18] : memref<2x1024xf32, #tpu.memory_space<any>> -> memref<1x1024xf32, #tpu.memory_space<any>>
      %28 = tpu.memref_squeeze %27 : memref<1x1024xf32, #tpu.memory_space<any>> -> memref<1024xf32, #tpu.memory_space<any>>
      %29 = tpu.memref_slice %arg3[%24, %c0_i32_16] : memref<2x2x!tpu.dma_semaphore, #tpu.memory_space<semaphore_mem>> -> memref<1x1x!tpu.dma_semaphore, #tpu.memory_space<semaphore_mem>>
      %30 = tpu.memref_squeeze %29 : memref<1x1x!tpu.dma_semaphore, #tpu.memory_space<semaphore_mem>> -> memref<!tpu.dma_semaphore, #tpu.memory_space<semaphore_mem>>
      tpu.wait_dma2 semaphore(%30 : memref<!tpu.dma_semaphore, #tpu.memory_space<semaphore_mem>>) src(%26 : memref<1024xf32, #tpu.memory_space<any>>) dst(%28 : memref<1024xf32, #tpu.memory_space<any>>)
      %c0_i32_19 = arith.constant 0 : i32
      %c0_i32_20 = arith.constant 0 : i32
      %c1_i32_21 = arith.constant 1 : i32
      %c0_i32_22 = arith.constant 0 : i32
      %31 = tpu.memref_slice %arg1[%c0_i32_19, %c0_i32_22] : memref<2x1024xf32, #tpu.memory_space<any>> -> memref<1x1024xf32, #tpu.memory_space<any>>
      %32 = tpu.memref_squeeze %31 : memref<1x1024xf32, #tpu.memory_space<any>> -> memref<1024xf32, #tpu.memory_space<any>>
      %c0_i32_23 = arith.constant 0 : i32
      %33 = tpu.memref_slice %arg2[%c0_i32_20, %c0_i32_23] : memref<2x1024xf32, #tpu.memory_space<any>> -> memref<1x1024xf32, #tpu.memory_space<any>>
      %34 = tpu.memref_squeeze %33 : memref<1x1024xf32, #tpu.memory_space<any>> -> memref<1024xf32, #tpu.memory_space<any>>
      %35 = tpu.memref_slice %arg3[%24, %c1_i32_21] : memref<2x2x!tpu.dma_semaphore, #tpu.memory_space<semaphore_mem>> -> memref<1x1x!tpu.dma_semaphore, #tpu.memory_space<semaphore_mem>>
      %36 = tpu.memref_squeeze %35 : memref<1x1x!tpu.dma_semaphore, #tpu.memory_space<semaphore_mem>> -> memref<!tpu.dma_semaphore, #tpu.memory_space<semaphore_mem>>
      tpu.wait_dma2 semaphore(%36 : memref<!tpu.dma_semaphore, #tpu.memory_space<semaphore_mem>>) src(%32 : memref<1024xf32, #tpu.memory_space<any>>) dst(%34 : memref<1024xf32, #tpu.memory_space<any>>)
    } else {
    }
    return
  }
}

</mosaic_0001>

<llo_original>
// kernel: tpu_custom_call.1
$region0: #{tpu_custom_call.1}
  #allocation0 [shape = 'u32[]', space=smem, size = 0x4, offset = 0x4, fixed_abs, tag = 'smem constant byte address 0x4 - core index']
  #allocation1 [shape = 'u32[72,128]{1,0:T(1,128)}', space=vmem, size = 0x9000, scoped, tag = 'internal scratch']
  #allocation2 [shape = 's32[4]{0}', space=sflag, size = 0x10, scoped, tag = 'scratch operand']
  #allocation3 [shape = 's32[]', space=sflag, size = 0x4, offset = 0, fixed_abs, tag = 'sflag constant byte address 0x0 - dummy sync flag']
  #allocation5 [shape = 's32[]', space=sflag, size = 0x4, offset = 0, fixed_abs, tag = 'sflag constant byte address 0x0 - dummy sync flag']
  %s0 = inlined_call_operand.hbm [shape: f32[2,1024], index: 0, kind: input, shape index: {}]
  %s1 = inlined_call_operand.hbm [shape: f32[2,1024], index: 1, kind: output, shape index: {}]
  %s2 = sld [smem:[#allocation0]]
  $region10: #{tpu_custom_call.1} parent=0
    _
  %s4 = ssub.s32 1, %s2
  %s5 = scalar_select 0, %s4, %s2
  $region1: #{tpu_custom_call.1} parent=0
    #allocation4 [shape = 'u32[3]{0}', space=smem, size = 0xc, scoped, tag = 'DMA stride descriptor']
    #allocation6 [shape = 'u32[3]{0}', space=smem, size = 0xc, scoped, tag = 'DMA stride descriptor']
    %s6 = ssub.s32 0, 0
    %s7 = ssub.s32 0, 0
    %p8 = scmp.ge.s32.totalorder 0, 2
    // Predicated region
    $region2: #{tpu_custom_call.1} parent=1 // pred_check
      %p9 = pneg %p8
    $region3: #{tpu_custom_call.1} parent=1 // pred_check_branch
      %11 = sbr.rel (%p9) target = $region5
    $region4: #{tpu_custom_call.1} parent=1 // pred_region
      %s12 = smul.u32 0, 2
      %s13 = scalar_lea.sflag [#allocation2], %s12
      %15 = dma.done %s13, 128
      %s16 = sadd.s32 1, %s12
      %s17 = scalar_lea.sflag [#allocation2], %s16
      %19 = dma.done %s17, 128
    $region5: #{tpu_custom_call.1} parent=1 // pred_fallthru
      _
    %s20 = smul.u32 0, 2
    %s21 = smul.u32 0, 16
    %s22 = sadd.s32 0, %s21
    %s23 = scalar_lea.hbm %s0, %s22
    %s24 = sshrl.u32 %s20, 1
    %s25 = sand.u32 %s20, 1
    %s26 = smul.u32 %s24, 16
    %s27 = sadd.s32 %s25, %s26
    %s28 = scalar_lea.hbm %s1, %s27
    %s29 = smul.u32 0, 2
    %s30 = scalar_lea.sflag [#allocation2], %s29
    %s32 = sshll.u32 1, 14
    %s33 = sxor.u32 4294967295, %s32
    %s35 = sshll.u32 %s23, 4
    %s36 = int_to_ptr.hbm [resolvable:$true] %s35
    %s37 = sshll.u32 %s28, 4
    %s38 = int_to_ptr.hbm [resolvable:$true] %s37
    %42 = sst [smem:[#allocation4]] 32
    %s43 = scalar_lea.smem [#allocation4], 1
    %44 = sst [smem:[%s43]] 32
    %s45 = scalar_lea.smem [#allocation4], 2
    %46 = sst [smem:[%s45]] 1
    %48 = dma.general %s36, 128, %s38, %s30, [#allocation3], [#allocation4], 0, 0
    %s49 = sadd.s32 0, 1
    %s50 = sadd.s32 %s20, 1
    %s51 = sshrl.u32 %s49, 1
    %s52 = sand.u32 %s49, 1
    %s53 = smul.u32 %s51, 16
    %s54 = sadd.s32 %s52, %s53
    %s55 = scalar_lea.hbm %s0, %s54
    %s56 = sshrl.u32 %s50, 1
    %s57 = sand.u32 %s50, 1
    %s58 = smul.u32 %s56, 16
    %s59 = sadd.s32 %s57, %s58
    %s60 = scalar_lea.hbm %s1, %s59
    %s61 = sadd.s32 1, %s29
    %s62 = scalar_lea.sflag [#allocation2], %s61
    %s64 = sshll.u32 1, 14
    %s65 = sxor.u32 4294967295, %s64
    %s67 = sshll.u32 %s55, 4
    %s68 = int_to_ptr.hbm [resolvable:$true] %s67
    %s69 = sshll.u32 %s60, 4
    %s70 = int_to_ptr.hbm [resolvable:$true] %s69
    %74 = sst [smem:[#allocation6]] 32
    %s75 = scalar_lea.smem [#allocation6], 1
    %76 = sst [smem:[%s75]] 32
    %s77 = scalar_lea.smem [#allocation6], 2
    %78 = sst [smem:[%s77]] 1
    %80 = dma.general %s68, 128, %s70, %s62, [#allocation5], [#allocation6], 0, 0
    %p81 = scmp.eq.s32.totalorder 0, 0
    // Predicated region
    $region6: #{tpu_custom_call.1} parent=1 // pred_check
      %p82 = pneg %p81
    $region7: #{tpu_custom_call.1} parent=1 // pred_check_branch
      %84 = sbr.rel (%p82) target = $region9
    $region8: #{tpu_custom_call.1} parent=1 // pred_region
      %86 = dma.done %s30, 128
      %88 = dma.done %s62, 128
    $region9: #{tpu_custom_call.1} parent=1 // pred_fallthru
      _
  %89 = vsyncmov [#allocation2]
  %s90 = vpop.sfrf %89
  %p91 = scmp.eq.s32.totalorder %s90, 0
  %p92 = pneg %p91
  %94 = shalt.err (%p92)
  %s95 = scalar_lea.sflag [#allocation2], 1
  %96 = vsyncmov %s95
  %s97 = vpop.sfrf %96
  %p98 = scmp.eq.s32.totalorder %s97, 0
  %p99 = pneg %p98
  %101 = shalt.err (%p99)
  %s102 = scalar_lea.sflag [#allocation2], 2
  %103 = vsyncmov %s102
  %s104 = vpop.sfrf %103
  %p105 = scmp.eq.s32.totalorder %s104, 0
  %p106 = pneg %p105
  %108 = shalt.err (%p106)
  %s109 = scalar_lea.sflag [#allocation2], 3
  %110 = vsyncmov %s109
  %s111 = vpop.sfrf %110
  %p112 = scmp.eq.s32.totalorder %s111, 0
  %p113 = pneg %p112
  %115 = shalt.err (%p113)

</llo_original>
